<compile_context>
chip_gen: v5e
topology: v5e:2x2
jax: 0.10.0
libtpu: 0.0.40
codegen_flags: <defaults>
</compile_context>

<pallas_src>
import jax
import jax.numpy as jnp
from jax import lax
from jax.experimental import pallas as pl
from jax.experimental.pallas import tpu as pltpu

EPS = 1e-5
LANE = 128  # lane width: pad every feature axis to a multiple of this


# ----------------------------- kernel ---------------------------------------

def _bn_train(h, gamma, beta):
    """BatchNorm1d training-mode forward, one-pass stats + fused scale/shift.

    var = E[h^2] - mean^2 ; y = h * (gamma*rsqrt(var+eps)) + (beta - mean*scale)
    Zero-padded columns stay exactly zero (gamma/beta padded with zeros).
    """
    mean = jnp.mean(h, axis=0, keepdims=True)
    ex2 = jnp.mean(h * h, axis=0, keepdims=True)
    var = ex2 - mean * mean
    scale = gamma * lax.rsqrt(var + EPS)
    shift = beta - mean * scale
    return h * scale + shift


def mlp_kernel(x_ref,
               w1_ref, b1_ref, g1_ref, be1_ref,
               w2_ref, b2_ref, g2_ref, be2_ref,
               w3_ref, b3_ref,
               o_ref):
    x = x_ref[...]  # already f32, no cast needed

    # layer 0: Linear + ReLU + BatchNorm1d + Dropout(0.0)
    h = jnp.dot(x, w1_ref[...], preferred_element_type=jnp.float32) + b1_ref[...]
    h = jnp.maximum(h, 0.0)
    h = _bn_train(h, g1_ref[...], be1_ref[...])

    # layer 1: Linear + Tanh + BatchNorm1d + Dropout(0.0)
    h = jnp.dot(h, w2_ref[...], preferred_element_type=jnp.float32) + b2_ref[...]
    h = jnp.tanh(h)
    h = _bn_train(h, g2_ref[...], be2_ref[...])

    # output layer: Linear + Sigmoid (EUP exp + EUP approx reciprocal)
    h = jnp.dot(h, w3_ref[...], preferred_element_type=jnp.float32) + b3_ref[...]
    o_ref[...] = pl.reciprocal(1.0 + jnp.exp(-h), approx=True).astype(o_ref.dtype)


# ----------------------------- wrapper ---------------------------------------

_PARAM_ORDER = ("w1", "b1", "g1", "be1", "w2", "b2", "g2", "be2", "w3", "b3")


def _round_up(n):
    return max(LANE, pl.cdiv(n, LANE) * LANE)


def pad_params(params):
    """Zero-pad every parameter's feature axes to a multiple of 128 lanes."""
    def cpad(a):  # pad last dim
        return jnp.pad(a, ((0, 0), (0, _round_up(a.shape[1]) - a.shape[1])))

    def wpad(w):  # pad both dims
        return jnp.pad(w, ((0, _round_up(w.shape[0]) - w.shape[0]),
                           (0, _round_up(w.shape[1]) - w.shape[1])))

    out = {}
    for k in _PARAM_ORDER:
        out[k] = wpad(params[k]) if k.startswith("w") else cpad(params[k])
    return out


def neural_net_forward(x, params, *, batch_per_call):
    """Fused forward for many independent NeuralNet.forward() calls.

    x: (N, in_features) f32 with N = num_calls * batch_per_call.  Each
    consecutive group of `batch_per_call` rows is one forward() call of the
    PyTorch module (BatchNorm1d train-mode statistics are computed per group).
    Returns (N, out_features) f32.
    """
    N, in_dim = x.shape
    B = batch_per_call
    assert N % B == 0, "N must be a multiple of batch_per_call"
    assert B % 8 == 0, "batch_per_call must be a multiple of 8 (sublane)"
    num_calls = N // B

    out_dim = params["w3"].shape[1]
    pp = pad_params(params)
    Fp = pp["w1"].shape[0]      # padded input width
    H1p = pp["w1"].shape[1]
    H2p = pp["w2"].shape[1]
    Op = pp["w3"].shape[1]      # padded output width (lane-dense store)

    # lane-dense input: zero-pad feature columns
    x_p = jnp.pad(x, ((0, 0), (0, Fp - in_dim)))

    # input/output tiles walk the batch-group axis; weights stay VMEM-resident
    x_spec = pl.BlockSpec((B, Fp), lambda g: (g, 0))
    out_spec = pl.BlockSpec((B, Op), lambda g: (g, 0))

    def resident_spec(a):
        nd = a.ndim
        return pl.BlockSpec(a.shape, lambda g, _nd=nd: (0,) * _nd)

    param_ops = [pp[k] for k in _PARAM_ORDER]

    cost = pl.CostEstimate(
        flops=int(2 * N * (Fp * H1p + H1p * H2p + H2p * Op)),
        transcendentals=int(N * (H2p + 2 * Op)),   # tanh + exp + reciprocal
        bytes_accessed=int(4 * (x_p.size + sum(p.size for p in param_ops) + N * Op)),
    )

    out_p = pl.pallas_call(
        mlp_kernel,
        out_shape=jax.ShapeDtypeStruct((N, Op), jnp.float32),
        grid_spec=pltpu.PrefetchScalarGridSpec(
            num_scalar_prefetch=0,
            grid=(num_calls,),
            in_specs=[x_spec] + [resident_spec(p) for p in param_ops],
            out_specs=out_spec,
        ),
        compiler_params=pltpu.CompilerParams(
            dimension_semantics=("parallel",)),   # shards groups across v7x TCs
        cost_estimate=cost,
    )(x_p, *param_ops)

    return out_p[:, :out_dim]


# ----------------------------- init & reference ------------------------------

def init_params(key, layers):
    """Deterministic init. Linear weights stored transposed as (in, out).
    BatchNorm gamma=1, beta=0 (PyTorch default init)."""
    k = jax.random.split(key, 6)
    l0, l1, l2, l3 = layers

    def lin(kw, kb, fan_in, fan_out):
        bound = 1.0 / jnp.sqrt(fan_in)
        w = jax.random.uniform(kw, (fan_in, fan_out), jnp.float32, -bound, bound)
        b = jax.random.uniform(kb, (1, fan_out), jnp.float32, -bound, bound)
        return w, b

    w1, b1 = lin(k[0], k[1], l0, l1)
    w2, b2 = lin(k[2], k[3], l1, l2)
    w3, b3 = lin(k[4], k[5], l2, l3)
    return {
        "w1": w1, "b1": b1, "g1": jnp.ones((1, l1), jnp.float32), "be1": jnp.zeros((1, l1), jnp.float32),
        "w2": w2, "b2": b2, "g2": jnp.ones((1, l2), jnp.float32), "be2": jnp.zeros((1, l2), jnp.float32),
        "w3": w3, "b3": b3,
    }


def _bn_ref(h, gamma, beta):
    mean = jnp.mean(h, axis=0, keepdims=True)
    var = jnp.mean((h - mean) ** 2, axis=0, keepdims=True)
    return gamma * (h - mean) / jnp.sqrt(var + EPS) + beta


def reference_forward(x, params):
    """Pure-JAX reference of one forward() call (classic two-pass BN form)."""
    h = x @ params["w1"] + params["b1"]
    h = jnp.maximum(h, 0.0)
    h = _bn_ref(h, params["g1"], params["be1"])
    h = h @ params["w2"] + params["b2"]
    h = jnp.tanh(h)
    h = _bn_ref(h, params["g2"], params["be2"])
    h = h @ params["w3"] + params["b3"]
    return jax.nn.sigmoid(h)


# ----------------------------- demo ------------------------------------------

if __name__ == "__main__":
    # NeuralNet(layers=[16, 32, 32, 8], dropoutRates=[0.0, 0.0], l2Reg=0.0,
    #           inputActivation='relu', hiddenActivation='tanh',
    #           outputActivation='sigmoid')
    layers = [16, 32, 32, 8]
    batch_per_call = 8     # one PyTorch forward() call per grid step
    num_calls = 4          # fused into a single pallas_call

    key = jax.random.PRNGKey(0)
    kx, kp = jax.random.split(key)
    N = num_calls * batch_per_call
    x = jax.random.normal(kx, (N, layers[0]), dtype=jnp.float32)
    params = init_params(kp, layers)

    out = neural_net_forward(x, params, batch_per_call=batch_per_call)
    out = jax.block_until_ready(out)

    # reference: apply the module's forward independently per mini-batch group
    ref = jnp.concatenate(
        [reference_forward(x[i * batch_per_call:(i + 1) * batch_per_call], params)
         for i in range(num_calls)],
        axis=0,
    )

    assert out.shape == (N, layers[-1])
    # approx=True reciprocal in the sigmoid -> ~1e-3 relative error budget
    assert jnp.allclose(out, ref, atol=5e-3, rtol=5e-3), "mismatch vs JAX reference"

    print("KERNEL_OK")
</pallas_src>

<mosaic_0001>
module attributes {stable_mosaic.version = 11 : i64} {
  func.func @mlp_kernel(%arg0: i32, %arg1: memref<8x128xf32, #tpu.memory_space<vmem>>, %arg2: memref<128x128xf32, #tpu.memory_space<vmem>>, %arg3: memref<1x128xf32, #tpu.memory_space<vmem>>, %arg4: memref<1x128xf32, #tpu.memory_space<vmem>>, %arg5: memref<1x128xf32, #tpu.memory_space<vmem>>, %arg6: memref<128x128xf32, #tpu.memory_space<vmem>>, %arg7: memref<1x128xf32, #tpu.memory_space<vmem>>, %arg8: memref<1x128xf32, #tpu.memory_space<vmem>>, %arg9: memref<1x128xf32, #tpu.memory_space<vmem>>, %arg10: memref<128x128xf32, #tpu.memory_space<vmem>>, %arg11: memref<1x128xf32, #tpu.memory_space<vmem>>, %arg12: memref<8x128xf32, #tpu.memory_space<vmem>>) attributes {dimension_semantics = [#tpu.dimension_semantics<parallel>], iteration_bounds = array<i64: 4>, scalar_prefetch = 0 : i64, scratch_operands = 0 : i64, tpu.core_type = #tpu.core_type<tc>, window_params = [{transform_indices = @transform_0, window_bounds = array<i64: 8, 128>}, {pipeline_mode = #tpu.pipeline_mode<synchronous>, transform_indices = @transform_1, window_bounds = array<i64: 128, 128>}, {pipeline_mode = #tpu.pipeline_mode<synchronous>, transform_indices = @transform_2, window_bounds = array<i64: 1, 128>}, {pipeline_mode = #tpu.pipeline_mode<synchronous>, transform_indices = @transform_3, window_bounds = array<i64: 1, 128>}, {pipeline_mode = #tpu.pipeline_mode<synchronous>, transform_indices = @transform_4, window_bounds = array<i64: 1, 128>}, {pipeline_mode = #tpu.pipeline_mode<synchronous>, transform_indices = @transform_5, window_bounds = array<i64: 128, 128>}, {pipeline_mode = #tpu.pipeline_mode<synchronous>, transform_indices = @transform_6, window_bounds = array<i64: 1, 128>}, {pipeline_mode = #tpu.pipeline_mode<synchronous>, transform_indices = @transform_7, window_bounds = array<i64: 1, 128>}, {pipeline_mode = #tpu.pipeline_mode<synchronous>, transform_indices = @transform_8, window_bounds = array<i64: 1, 128>}, {pipeline_mode = #tpu.pipeline_mode<synchronous>, transform_indices = @transform_9, window_bounds = array<i64: 128, 128>}, {pipeline_mode = #tpu.pipeline_mode<synchronous>, transform_indices = @transform_10, window_bounds = array<i64: 1, 128>}, {transform_indices = @transform_11, window_bounds = array<i64: 8, 128>}]} {
    %c0 = arith.constant 0 : index
    %c0_0 = arith.constant 0 : index
    %0 = vector.load %arg1[%c0, %c0_0] : memref<8x128xf32, #tpu.memory_space<vmem>>, vector<8x128xf32>
    %c0_1 = arith.constant 0 : index
    %c0_2 = arith.constant 0 : index
    %1 = vector.load %arg2[%c0_1, %c0_2] : memref<128x128xf32, #tpu.memory_space<vmem>>, vector<128x128xf32>
    %cst = arith.constant dense<0.000000e+00> : vector<8x128xf32>
    %2 = tpu.matmul %0, %1, %cst {dimension_numbers = #tpu.dot_dimension_numbers<[1], [0], [0], [1], [0, 0, 1, 1], [], []>} : vector<8x128xf32>, vector<128x128xf32>, vector<8x128xf32> -> vector<8x128xf32>
    %c0_3 = arith.constant 0 : index
    %c0_4 = arith.constant 0 : index
    %3 = vector.load %arg3[%c0_3, %c0_4] : memref<1x128xf32, #tpu.memory_space<vmem>>, vector<1x128xf32>
    %4 = vector.broadcast %3 : vector<1x128xf32> to vector<8x128xf32>
    %5 = arith.addf %2, %4 : vector<8x128xf32>
    %cst_5 = arith.constant 0.000000e+00 : f32
    %6 = vector.broadcast %cst_5 : f32 to vector<8x128xf32>
    %7 = arith.maximumf %5, %6 : vector<8x128xf32>
    %c0_6 = arith.constant 0 : index
    %c0_7 = arith.constant 0 : index
    %8 = vector.load %arg4[%c0_6, %c0_7] : memref<1x128xf32, #tpu.memory_space<vmem>>, vector<1x128xf32>
    %c0_8 = arith.constant 0 : index
    %c0_9 = arith.constant 0 : index
    %9 = vector.load %arg5[%c0_8, %c0_9] : memref<1x128xf32, #tpu.memory_space<vmem>>, vector<1x128xf32>
    %cst_10 = arith.constant dense<0.000000e+00> : vector<128xf32>
    %10 = vector.multi_reduction <add>, %7, %cst_10 [0] : vector<8x128xf32> to vector<128xf32>
    %11 = vector.shape_cast %10 : vector<128xf32> to vector<1x128xf32>
    %cst_11 = arith.constant 8.000000e+00 : f32
    %12 = vector.broadcast %cst_11 : f32 to vector<1x128xf32>
    %13 = arith.divf %11, %12 : vector<1x128xf32>
    %14 = arith.mulf %7, %7 : vector<8x128xf32>
    %cst_12 = arith.constant dense<0.000000e+00> : vector<128xf32>
    %15 = vector.multi_reduction <add>, %14, %cst_12 [0] : vector<8x128xf32> to vector<128xf32>
    %16 = vector.shape_cast %15 : vector<128xf32> to vector<1x128xf32>
    %cst_13 = arith.constant 8.000000e+00 : f32
    %17 = vector.broadcast %cst_13 : f32 to vector<1x128xf32>
    %18 = arith.divf %16, %17 : vector<1x128xf32>
    %19 = arith.mulf %13, %13 : vector<1x128xf32>
    %20 = arith.subf %18, %19 : vector<1x128xf32>
    %cst_14 = arith.constant 9.99999974E-6 : f32
    %21 = vector.broadcast %cst_14 : f32 to vector<1x128xf32>
    %22 = arith.addf %20, %21 : vector<1x128xf32>
    %23 = math.rsqrt %22 : vector<1x128xf32>
    %24 = arith.mulf %8, %23 : vector<1x128xf32>
    %25 = arith.mulf %13, %24 : vector<1x128xf32>
    %26 = arith.subf %9, %25 : vector<1x128xf32>
    %27 = vector.broadcast %24 : vector<1x128xf32> to vector<8x128xf32>
    %28 = arith.mulf %7, %27 : vector<8x128xf32>
    %29 = vector.broadcast %26 : vector<1x128xf32> to vector<8x128xf32>
    %30 = arith.addf %28, %29 : vector<8x128xf32>
    %c0_15 = arith.constant 0 : index
    %c0_16 = arith.constant 0 : index
    %31 = vector.load %arg6[%c0_15, %c0_16] : memref<128x128xf32, #tpu.memory_space<vmem>>, vector<128x128xf32>
    %cst_17 = arith.constant dense<0.000000e+00> : vector<8x128xf32>
    %32 = tpu.matmul %30, %31, %cst_17 {dimension_numbers = #tpu.dot_dimension_numbers<[1], [0], [0], [1], [0, 0, 1, 1], [], []>} : vector<8x128xf32>, vector<128x128xf32>, vector<8x128xf32> -> vector<8x128xf32>
    %c0_18 = arith.constant 0 : index
    %c0_19 = arith.constant 0 : index
    %33 = vector.load %arg7[%c0_18, %c0_19] : memref<1x128xf32, #tpu.memory_space<vmem>>, vector<1x128xf32>
    %34 = vector.broadcast %33 : vector<1x128xf32> to vector<8x128xf32>
    %35 = arith.addf %32, %34 : vector<8x128xf32>
    %36 = math.tanh %35 : vector<8x128xf32>
    %c0_20 = arith.constant 0 : index
    %c0_21 = arith.constant 0 : index
    %37 = vector.load %arg8[%c0_20, %c0_21] : memref<1x128xf32, #tpu.memory_space<vmem>>, vector<1x128xf32>
    %c0_22 = arith.constant 0 : index
    %c0_23 = arith.constant 0 : index
    %38 = vector.load %arg9[%c0_22, %c0_23] : memref<1x128xf32, #tpu.memory_space<vmem>>, vector<1x128xf32>
    %cst_24 = arith.constant dense<0.000000e+00> : vector<128xf32>
    %39 = vector.multi_reduction <add>, %36, %cst_24 [0] : vector<8x128xf32> to vector<128xf32>
    %40 = vector.shape_cast %39 : vector<128xf32> to vector<1x128xf32>
    %cst_25 = arith.constant 8.000000e+00 : f32
    %41 = vector.broadcast %cst_25 : f32 to vector<1x128xf32>
    %42 = arith.divf %40, %41 : vector<1x128xf32>
    %43 = arith.mulf %36, %36 : vector<8x128xf32>
    %cst_26 = arith.constant dense<0.000000e+00> : vector<128xf32>
    %44 = vector.multi_reduction <add>, %43, %cst_26 [0] : vector<8x128xf32> to vector<128xf32>
    %45 = vector.shape_cast %44 : vector<128xf32> to vector<1x128xf32>
    %cst_27 = arith.constant 8.000000e+00 : f32
    %46 = vector.broadcast %cst_27 : f32 to vector<1x128xf32>
    %47 = arith.divf %45, %46 : vector<1x128xf32>
    %48 = arith.mulf %42, %42 : vector<1x128xf32>
    %49 = arith.subf %47, %48 : vector<1x128xf32>
    %cst_28 = arith.constant 9.99999974E-6 : f32
    %50 = vector.broadcast %cst_28 : f32 to vector<1x128xf32>
    %51 = arith.addf %49, %50 : vector<1x128xf32>
    %52 = math.rsqrt %51 : vector<1x128xf32>
    %53 = arith.mulf %37, %52 : vector<1x128xf32>
    %54 = arith.mulf %42, %53 : vector<1x128xf32>
    %55 = arith.subf %38, %54 : vector<1x128xf32>
    %56 = vector.broadcast %53 : vector<1x128xf32> to vector<8x128xf32>
    %57 = arith.mulf %36, %56 : vector<8x128xf32>
    %58 = vector.broadcast %55 : vector<1x128xf32> to vector<8x128xf32>
    %59 = arith.addf %57, %58 : vector<8x128xf32>
    %c0_29 = arith.constant 0 : index
    %c0_30 = arith.constant 0 : index
    %60 = vector.load %arg10[%c0_29, %c0_30] : memref<128x128xf32, #tpu.memory_space<vmem>>, vector<128x128xf32>
    %cst_31 = arith.constant dense<0.000000e+00> : vector<8x128xf32>
    %61 = tpu.matmul %59, %60, %cst_31 {dimension_numbers = #tpu.dot_dimension_numbers<[1], [0], [0], [1], [0, 0, 1, 1], [], []>} : vector<8x128xf32>, vector<128x128xf32>, vector<8x128xf32> -> vector<8x128xf32>
    %c0_32 = arith.constant 0 : index
    %c0_33 = arith.constant 0 : index
    %62 = vector.load %arg11[%c0_32, %c0_33] : memref<1x128xf32, #tpu.memory_space<vmem>>, vector<1x128xf32>
    %63 = vector.broadcast %62 : vector<1x128xf32> to vector<8x128xf32>
    %64 = arith.addf %61, %63 : vector<8x128xf32>
    %cst_34 = arith.constant 0.000000e+00 : f32
    %65 = vector.broadcast %cst_34 : f32 to vector<8x128xf32>
    %66 = arith.subf %65, %64 : vector<8x128xf32>
    %67 = math.exp %66 : vector<8x128xf32>
    %cst_35 = arith.constant 1.000000e+00 : f32
    %68 = vector.broadcast %cst_35 : f32 to vector<8x128xf32>
    %69 = arith.addf %68, %67 : vector<8x128xf32>
    %70 = tpu.reciprocal %69 {approx = true} : vector<8x128xf32> -> vector<8x128xf32>
    %c0_36 = arith.constant 0 : index
    %c0_37 = arith.constant 0 : index
    %71 = vector.load %arg12[%c0_36, %c0_37] : memref<8x128xf32, #tpu.memory_space<vmem>>, vector<8x128xf32>
    tpu.vector_store %arg12[%c0_36, %c0_37], %70 {strides = array<i32>} : memref<8x128xf32, #tpu.memory_space<vmem>>, vector<8x128xf32>,
    return
  }
  func.func @transform_0(%arg0: i32) -> (i32, i32) {
    %c0_i32 = arith.constant 0 : i32
    %c0_i32_0 = arith.constant 0 : i32
    return %arg0, %c0_i32 : i32, i32
  }
  func.func @transform_1(%arg0: i32) -> (i32, i32) {
    %c0_i32 = arith.constant 0 : i32
    %c0_i32_0 = arith.constant 0 : i32
    %c0_i32_1 = arith.constant 0 : i32
    return %c0_i32, %c0_i32_0 : i32, i32
  }
  func.func @transform_2(%arg0: i32) -> (i32, i32) {
    %c0_i32 = arith.constant 0 : i32
    %c0_i32_0 = arith.constant 0 : i32
    %c0_i32_1 = arith.constant 0 : i32
    return %c0_i32, %c0_i32_0 : i32, i32
  }
  func.func @transform_3(%arg0: i32) -> (i32, i32) {
    %c0_i32 = arith.constant 0 : i32
    %c0_i32_0 = arith.constant 0 : i32
    %c0_i32_1 = arith.constant 0 : i32
    return %c0_i32, %c0_i32_0 : i32, i32
  }
  func.func @transform_4(%arg0: i32) -> (i32, i32) {
    %c0_i32 = arith.constant 0 : i32
    %c0_i32_0 = arith.constant 0 : i32
    %c0_i32_1 = arith.constant 0 : i32
    return %c0_i32, %c0_i32_0 : i32, i32
  }
  func.func @transform_5(%arg0: i32) -> (i32, i32) {
    %c0_i32 = arith.constant 0 : i32
    %c0_i32_0 = arith.constant 0 : i32
    %c0_i32_1 = arith.constant 0 : i32
    return %c0_i32, %c0_i32_0 : i32, i32
  }
  func.func @transform_6(%arg0: i32) -> (i32, i32) {
    %c0_i32 = arith.constant 0 : i32
    %c0_i32_0 = arith.constant 0 : i32
    %c0_i32_1 = arith.constant 0 : i32
    return %c0_i32, %c0_i32_0 : i32, i32
  }
  func.func @transform_7(%arg0: i32) -> (i32, i32) {
    %c0_i32 = arith.constant 0 : i32
    %c0_i32_0 = arith.constant 0 : i32
    %c0_i32_1 = arith.constant 0 : i32
    return %c0_i32, %c0_i32_0 : i32, i32
  }
  func.func @transform_8(%arg0: i32) -> (i32, i32) {
    %c0_i32 = arith.constant 0 : i32
    %c0_i32_0 = arith.constant 0 : i32
    %c0_i32_1 = arith.constant 0 : i32
    return %c0_i32, %c0_i32_0 : i32, i32
  }
  func.func @transform_9(%arg0: i32) -> (i32, i32) {
    %c0_i32 = arith.constant 0 : i32
    %c0_i32_0 = arith.constant 0 : i32
    %c0_i32_1 = arith.constant 0 : i32
    return %c0_i32, %c0_i32_0 : i32, i32
  }
  func.func @transform_10(%arg0: i32) -> (i32, i32) {
    %c0_i32 = arith.constant 0 : i32
    %c0_i32_0 = arith.constant 0 : i32
    %c0_i32_1 = arith.constant 0 : i32
    return %c0_i32, %c0_i32_0 : i32, i32
  }
  func.func @transform_11(%arg0: i32) -> (i32, i32) {
    %c0_i32 = arith.constant 0 : i32
    %c0_i32_0 = arith.constant 0 : i32
    return %arg0, %c0_i32 : i32, i32
  }
}

</mosaic_0001>

<llo_original>
// kernel: tpu_custom_call.1
$region0: #{tpu_custom_call.1}
  #allocation0 [shape = 'u32[]', space=smem, size = 0x4, offset = 0x4, fixed_abs, tag = 'smem constant byte address 0x4 - core index']
  #allocation1 [shape = 'u32[72,128]{1,0:T(1,128)}', space=vmem, size = 0x9000, scoped, tag = 'internal scratch']
  %s0 = inlined_call_operand.hbm [shape: f32[32,128], index: 0, kind: input, shape index: {}]
  %s1 = inlined_call_operand.hbm [shape: f32[128,128], index: 1, kind: input, shape index: {}]
  %s2 = inlined_call_operand.vmem [shape: f32[1,128], index: 2, kind: input, shape index: {}]
  %s3 = inlined_call_operand.vmem [shape: f32[1,128], index: 3, kind: input, shape index: {}]
  %s4 = inlined_call_operand.vmem [shape: f32[1,128], index: 4, kind: input, shape index: {}]
  %s5 = inlined_call_operand.hbm [shape: f32[128,128], index: 5, kind: input, shape index: {}]
  %s6 = inlined_call_operand.vmem [shape: f32[1,128], index: 6, kind: input, shape index: {}]
  %s7 = inlined_call_operand.vmem [shape: f32[1,128], index: 7, kind: input, shape index: {}]
  %s8 = inlined_call_operand.vmem [shape: f32[1,128], index: 8, kind: input, shape index: {}]
  %s9 = inlined_call_operand.hbm [shape: f32[128,128], index: 9, kind: input, shape index: {}]
  %s10 = inlined_call_operand.vmem [shape: f32[1,128], index: 10, kind: input, shape index: {}]
  %s11 = inlined_call_operand.hbm [shape: f32[32,128], index: 11, kind: output, shape index: {}]
  %s12 = sld [smem:[#allocation0]]
  $region93: #{tpu_custom_call.1} parent=0
    _
  %s14 = ssub.s32 1, %s12
  %s15 = scalar_select 0, %s14, %s12
  $region1: #{tpu_custom_call.1} parent=0
    #allocation2 [shape = 'u8[8192]{0}', space=vmem, size = 0x2000, scoped, tag = 'input window, operand 0']
    #allocation3 [shape = 's32[2]{0}', space=sflag, size = 0x8, scoped, tag = 'scoped memory for tpu_custom_call.1']
    #allocation4 [shape = 's32[2]{0}', space=sflag, size = 0x8, scoped, tag = 'scoped memory for tpu_custom_call.1']
    #allocation5 [shape = 'u8[65536]{0}', space=vmem, size = 0x10000, scoped, tag = 'input window, operand 1, single buffered']
    #allocation6 [shape = 's32[1]{0}', space=sflag, size = 0x4, scoped, tag = 'scoped memory for tpu_custom_call.1']
    #allocation7 [shape = 'u8[65536]{0}', space=vmem, size = 0x10000, scoped, tag = 'input window, operand 5, single buffered']
    #allocation8 [shape = 'u8[65536]{0}', space=vmem, size = 0x10000, scoped, tag = 'input window, operand 9, single buffered']
    #allocation9 [shape = 's32[1]{0}', space=sflag, size = 0x4, scoped, tag = 'scoped memory for tpu_custom_call.1']
    #allocation10 [shape = 'u8[8192]{0}', space=vmem, size = 0x2000, scoped, tag = 'output window, operand 0']
    %16 = vsyncpa [#allocation3], 0
    %s17 = scalar_lea.sflag [#allocation3], 1
    %18 = vsyncpa %s17, 0
    %19 = vsyncpa [#allocation6], 0
    %20 = vsyncpa [#allocation9], 0
    %21 = vsyncpa [#allocation4], 0
    %s22 = scalar_lea.sflag [#allocation4], 1
    %23 = vsyncpa %s22, 0
    loop: start=0, step=1, limit=6
    $region2: #{tpu_custom_call.1} parent=1 // loop_pre_header
      _
    $region3: #{tpu_custom_call.1} parent=1 // loop_header
      %s25 = sphi 0, %s29
      %p26 = scmp.ge.s32.totalorder %s25, 6
      %s35 = sphi 0, %s37
      %s38 = sphi 0, %s35
      %s39 = sphi 0, %s38
      %s55 = sphi 0, %s39
      %s59 = sphi 0, %s59
      %s61 = sphi 0, %s59
      %s62 = sphi 0, %s61
      %s76 = sphi 0, %s62
      %s80 = sphi 0, %s80
      %s82 = sphi 0, %s80
      %s83 = sphi 0, %s82
      %s97 = sphi 0, %s83
      %s101 = sphi 0, %s101
      %s103 = sphi 0, %s101
      %s104 = sphi 0, %s103
      %s118 = sphi 0, %s104
      %s122 = sphi 0, %s122
      %s124 = sphi 0, %s122
      %s125 = sphi 0, %s124
      %s139 = sphi 0, %s125
      %s143 = sphi 0, %s143
      %s145 = sphi 0, %s143
      %s146 = sphi 0, %s145
      %s160 = sphi 0, %s146
      %s164 = sphi 0, %s164
      %s166 = sphi 0, %s164
      %s167 = sphi 0, %s166
      %s181 = sphi 0, %s167
      %s185 = sphi 0, %s185
      %s187 = sphi 0, %s185
      %s188 = sphi 0, %s187
      %s202 = sphi 0, %s188
      %s206 = sphi 0, %s206
      %s208 = sphi 0, %s206
      %s209 = sphi 0, %s208
      %s223 = sphi 0, %s209
      %s227 = sphi 0, %s227
      %s229 = sphi 0, %s227
      %s230 = sphi 0, %s229
      %s244 = sphi 0, %s230
      %s248 = sphi 0, %s248
      %s250 = sphi 0, %s248
      %s251 = sphi 0, %s250
      %s265 = sphi 0, %s251
      %s271 = sphi 0, %s273
      %s274 = sphi 0, %s271
      %s275 = sphi 0, %s274
      %s291 = sphi 0, %s275
    $region4: #{tpu_custom_call.1} parent=1 // loop_header_branch
      %28 = sbr.rel (%p26) target = $region8
    $region5: #{tpu_custom_call.1} parent=1 // loop_body
      %s30 = ssub.s32 %s25, 1
      %s31 = ssub.s32 %s25, 2
      %s32 = sadd.s32 %s25, 1
      %s33 = ssub.s32 %s25, %s32
      %p34 = scmp.eq.s32.totalorder %s33, 0
      %s36 = sadd.s32 %s35, 1
      %s37 = scalar_select %p34, %s35, %s36
      %p40 = pneg %p34
      %p41 = scmp.eq.s32.totalorder %s25, 3
      %p42 = por %p40, %p41
      %p43 = scmp.ne.s32.totalorder %s35, %s38
      %p44 = scmp.eq.s32.totalorder %s25, 0
      %p45 = por %p43, %p44
      %p46 = scmp.ne.s32.totalorder %s35, %s38
      %p47 = scmp.eq.s32.totalorder %s30, 3
      %p48 = por %p46, %p47
      %p49 = scmp.ne.s32.totalorder %s38, %s39
      %p50 = scmp.eq.s32.totalorder %s30, 0
      %p51 = por %p49, %p50
      %p52 = scmp.ne.s32.totalorder %s38, %s39
      %p53 = scmp.eq.s32.totalorder %s31, 3
      %p54 = por %p52, %p53
      %p56 = scmp.ne.s32.totalorder %s39, %s55
      %p57 = scmp.eq.s32.totalorder %s31, 0
      %p58 = por %p56, %p57
      %s60 = sadd.s32 %s59, 1
      %p63 = scmp.eq.s32.totalorder %s25, 3
      %p64 = scmp.ne.s32.totalorder %s59, %s61
      %p65 = scmp.eq.s32.totalorder %s25, 0
      %p66 = por %p64, %p65
      %p67 = scmp.ne.s32.totalorder %s59, %s61
      %p68 = scmp.eq.s32.totalorder %s30, 3
      %p69 = por %p67, %p68
      %p70 = scmp.ne.s32.totalorder %s61, %s62
      %p71 = scmp.eq.s32.totalorder %s30, 0
      %p72 = por %p70, %p71
      %p73 = scmp.ne.s32.totalorder %s61, %s62
      %p74 = scmp.eq.s32.totalorder %s31, 3
      %p75 = por %p73, %p74
      %p77 = scmp.ne.s32.totalorder %s62, %s76
      %p78 = scmp.eq.s32.totalorder %s31, 0
      %p79 = por %p77, %p78
      %s81 = sadd.s32 %s80, 1
      %p84 = scmp.eq.s32.totalorder %s25, 3
      %p85 = scmp.ne.s32.totalorder %s80, %s82
      %p86 = scmp.eq.s32.totalorder %s25, 0
      %p87 = por %p85, %p86
      %p88 = scmp.ne.s32.totalorder %s80, %s82
      %p89 = scmp.eq.s32.totalorder %s30, 3
      %p90 = por %p88, %p89
      %p91 = scmp.ne.s32.totalorder %s82, %s83
      %p92 = scmp.eq.s32.totalorder %s30, 0
      %p93 = por %p91, %p92
      %p94 = scmp.ne.s32.totalorder %s82, %s83
      %p95 = scmp.eq.s32.totalorder %s31, 3
      %p96 = por %p94, %p95
      %p98 = scmp.ne.s32.totalorder %s83, %s97
      %p99 = scmp.eq.s32.totalorder %s31, 0
      %p100 = por %p98, %p99
      %s102 = sadd.s32 %s101, 1
      %p105 = scmp.eq.s32.totalorder %s25, 3
      %p106 = scmp.ne.s32.totalorder %s101, %s103
      %p107 = scmp.eq.s32.totalorder %s25, 0
      %p108 = por %p106, %p107
      %p109 = scmp.ne.s32.totalorder %s101, %s103
      %p110 = scmp.eq.s32.totalorder %s30, 3
      %p111 = por %p109, %p110
      %p112 = scmp.ne.s32.totalorder %s103, %s104
      %p113 = scmp.eq.s32.totalorder %s30, 0
      %p114 = por %p112, %p113
      %p115 = scmp.ne.s32.totalorder %s103, %s104
      %p116 = scmp.eq.s32.totalorder %s31, 3
      %p117 = por %p115, %p116
      %p119 = scmp.ne.s32.totalorder %s104, %s118
      %p120 = scmp.eq.s32.totalorder %s31, 0
      %p121 = por %p119, %p120
      %s123 = sadd.s32 %s122, 1
      %p126 = scmp.eq.s32.totalorder %s25, 3
      %p127 = scmp.ne.s32.totalorder %s122, %s124
      %p128 = scmp.eq.s32.totalorder %s25, 0
      %p129 = por %p127, %p128
      %p130 = scmp.ne.s32.totalorder %s122, %s124
      %p131 = scmp.eq.s32.totalorder %s30, 3
      %p132 = por %p130, %p131
      %p133 = scmp.ne.s32.totalorder %s124, %s125
      %p134 = scmp.eq.s32.totalorder %s30, 0
      %p135 = por %p133, %p134
      %p136 = scmp.ne.s32.totalorder %s124, %s125
      %p137 = scmp.eq.s32.totalorder %s31, 3
      %p138 = por %p136, %p137
      %p140 = scmp.ne.s32.totalorder %s125, %s139
      %p141 = scmp.eq.s32.totalorder %s31, 0
      %p142 = por %p140, %p141
      %s144 = sadd.s32 %s143, 1
      %p147 = scmp.eq.s32.totalorder %s25, 3
      %p148 = scmp.ne.s32.totalorder %s143, %s145
      %p149 = scmp.eq.s32.totalorder %s25, 0
      %p150 = por %p148, %p149
      %p151 = scmp.ne.s32.totalorder %s143, %s145
      %p152 = scmp.eq.s32.totalorder %s30, 3
      %p153 = por %p151, %p152
      %p154 = scmp.ne.s32.totalorder %s145, %s146
      %p155 = scmp.eq.s32.totalorder %s30, 0
      %p156 = por %p154, %p155
      %p157 = scmp.ne.s32.totalorder %s145, %s146
      %p158 = scmp.eq.s32.totalorder %s31, 3
      %p159 = por %p157, %p158
      %p161 = scmp.ne.s32.totalorder %s146, %s160
      %p162 = scmp.eq.s32.totalorder %s31, 0
      %p163 = por %p161, %p162
      %s165 = sadd.s32 %s164, 1
      %p168 = scmp.eq.s32.totalorder %s25, 3
      %p169 = scmp.ne.s32.totalorder %s164, %s166
      %p170 = scmp.eq.s32.totalorder %s25, 0
      %p171 = por %p169, %p170
      %p172 = scmp.ne.s32.totalorder %s164, %s166
      %p173 = scmp.eq.s32.totalorder %s30, 3
      %p174 = por %p172, %p173
      %p175 = scmp.ne.s32.totalorder %s166, %s167
      %p176 = scmp.eq.s32.totalorder %s30, 0
      %p177 = por %p175, %p176
      %p178 = scmp.ne.s32.totalorder %s166, %s167
      %p179 = scmp.eq.s32.totalorder %s31, 3
      %p180 = por %p178, %p179
      %p182 = scmp.ne.s32.totalorder %s167, %s181
      %p183 = scmp.eq.s32.totalorder %s31, 0
      %p184 = por %p182, %p183
      %s186 = sadd.s32 %s185, 1
      %p189 = scmp.eq.s32.totalorder %s25, 3
      %p190 = scmp.ne.s32.totalorder %s185, %s187
      %p191 = scmp.eq.s32.totalorder %s25, 0
      %p192 = por %p190, %p191
      %p193 = scmp.ne.s32.totalorder %s185, %s187
      %p194 = scmp.eq.s32.totalorder %s30, 3
      %p195 = por %p193, %p194
      %p196 = scmp.ne.s32.totalorder %s187, %s188
      %p197 = scmp.eq.s32.totalorder %s30, 0
      %p198 = por %p196, %p197
      %p199 = scmp.ne.s32.totalorder %s187, %s188
      %p200 = scmp.eq.s32.totalorder %s31, 3
      %p201 = por %p199, %p200
      %p203 = scmp.ne.s32.totalorder %s188, %s202
      %p204 = scmp.eq.s32.totalorder %s31, 0
      %p205 = por %p203, %p204
      %s207 = sadd.s32 %s206, 1
      %p210 = scmp.eq.s32.totalorder %s25, 3
      %p211 = scmp.ne.s32.totalorder %s206, %s208
      %p212 = scmp.eq.s32.totalorder %s25, 0
      %p213 = por %p211, %p212
      %p214 = scmp.ne.s32.totalorder %s206, %s208
      %p215 = scmp.eq.s32.totalorder %s30, 3
      %p216 = por %p214, %p215
      %p217 = scmp.ne.s32.totalorder %s208, %s209
      %p218 = scmp.eq.s32.totalorder %s30, 0
      %p219 = por %p217, %p218
      %p220 = scmp.ne.s32.totalorder %s208, %s209
      %p221 = scmp.eq.s32.totalorder %s31, 3
      %p222 = por %p220, %p221
      %p224 = scmp.ne.s32.totalorder %s209, %s223
      %p225 = scmp.eq.s32.totalorder %s31, 0
      %p226 = por %p224, %p225
      %s228 = sadd.s32 %s227, 1
      %p231 = scmp.eq.s32.totalorder %s25, 3
      %p232 = scmp.ne.s32.totalorder %s227, %s229
      %p233 = scmp.eq.s32.totalorder %s25, 0
      %p234 = por %p232, %p233
      %p235 = scmp.ne.s32.totalorder %s227, %s229
      %p236 = scmp.eq.s32.totalorder %s30, 3
      %p237 = por %p235, %p236
      %p238 = scmp.ne.s32.totalorder %s229, %s230
      %p239 = scmp.eq.s32.totalorder %s30, 0
      %p240 = por %p238, %p239
      %p241 = scmp.ne.s32.totalorder %s229, %s230
      %p242 = scmp.eq.s32.totalorder %s31, 3
      %p243 = por %p241, %p242
      %p245 = scmp.ne.s32.totalorder %s230, %s244
      %p246 = scmp.eq.s32.totalorder %s31, 0
      %p247 = por %p245, %p246
      %s249 = sadd.s32 %s248, 1
      %p252 = scmp.eq.s32.totalorder %s25, 3
      %p253 = scmp.ne.s32.totalorder %s248, %s250
      %p254 = scmp.eq.s32.totalorder %s25, 0
      %p255 = por %p253, %p254
      %p256 = scmp.ne.s32.totalorder %s248, %s250
      %p257 = scmp.eq.s32.totalorder %s30, 3
      %p258 = por %p256, %p257
      %p259 = scmp.ne.s32.totalorder %s250, %s251
      %p260 = scmp.eq.s32.totalorder %s30, 0
      %p261 = por %p259, %p260
      %p262 = scmp.ne.s32.totalorder %s250, %s251
      %p263 = scmp.eq.s32.totalorder %s31, 3
      %p264 = por %p262, %p263
      %p266 = scmp.ne.s32.totalorder %s251, %s265
      %p267 = scmp.eq.s32.totalorder %s31, 0
      %p268 = por %p266, %p267
      %s269 = ssub.s32 %s25, %s32
      %p270 = scmp.eq.s32.totalorder %s269, 0
      %s272 = sadd.s32 %s271, 1
      %s273 = scalar_select %p270, %s271, %s272
      %p276 = pneg %p270
      %p277 = scmp.eq.s32.totalorder %s25, 3
      %p278 = por %p276, %p277
      %p279 = scmp.ne.s32.totalorder %s271, %s274
      %p280 = scmp.eq.s32.totalorder %s25, 0
      %p281 = por %p279, %p280
      %p282 = scmp.ne.s32.totalorder %s271, %s274
      %p283 = scmp.eq.s32.totalorder %s30, 3
      %p284 = por %p282, %p283
      %p285 = scmp.ne.s32.totalorder %s274, %s275
      %p286 = scmp.eq.s32.totalorder %s30, 0
      %p287 = por %p285, %p286
      %p288 = scmp.ne.s32.totalorder %s274, %s275
      %p289 = scmp.eq.s32.totalorder %s31, 3
      %p290 = por %p288, %p289
      %p292 = scmp.ne.s32.totalorder %s275, %s291
      %p293 = scmp.eq.s32.totalorder %s31, 0
      %p294 = por %p292, %p293
      %p295 = scmp.le.s32.totalorder 1, %s25
      %p296 = scmp.lt.s32.totalorder %s25, 5
      %p297 = pnand %p295, %p296
      %p298 = pneg %p297
      // Predicated region
      $region9: #{tpu_custom_call.1} parent=5 // pred_check
        _
      $region10: #{tpu_custom_call.1} parent=5 // pred_check_branch
        %300 = sbr.rel (%p297) target = $region12
      $region11: #{tpu_custom_call.1} parent=5 // pred_region
        %s301 = ssub.s32 %s25, 1
        // Predicated region
        $region13: #{tpu_custom_call.1} parent=11 // pred_check
          %p302 = pneg %p72
        $region14: #{tpu_custom_call.1} parent=11 // pred_check_branch
          %304 = sbr.rel (%p302) target = $region16
        $region15: #{tpu_custom_call.1} parent=11 // pred_region
          %306 = vsyncadd [#allocation6], 0
          %s307 = sshll.u32 %s1, 4
          %s308 = int_to_ptr.hbm [resolvable:$true] %s307
          %s309 = sshll.u32 [#allocation5], 4
          %s310 = int_to_ptr.vmem [resolvable:$true] %s309
          %315 = dma.hbm_to_vmem [thread:$0]  %s308, 2048, %s310, [#allocation6], 128, 128, 8
        $region16: #{tpu_custom_call.1} parent=11 // pred_fallthru
          _
        // Predicated region
        $region17: #{tpu_custom_call.1} parent=11 // pred_check
          %p316 = pneg %p93
        $region18: #{tpu_custom_call.1} parent=11 // pred_check_branch
          %318 = sbr.rel (%p316) target = $region20
        $region19: #{tpu_custom_call.1} parent=11 // pred_region
          _
        $region20: #{tpu_custom_call.1} parent=11 // pred_fallthru
          _
        // Predicated region
        $region21: #{tpu_custom_call.1} parent=11 // pred_check
          %p319 = pneg %p114
        $region22: #{tpu_custom_call.1} parent=11 // pred_check_branch
          %321 = sbr.rel (%p319) target = $region24
        $region23: #{tpu_custom_call.1} parent=11 // pred_region
          _
        $region24: #{tpu_custom_call.1} parent=11 // pred_fallthru
          _
        // Predicated region
        $region25: #{tpu_custom_call.1} parent=11 // pred_check
          %p322 = pneg %p135
        $region26: #{tpu_custom_call.1} parent=11 // pred_check_branch
          %324 = sbr.rel (%p322) target = $region28
        $region27: #{tpu_custom_call.1} parent=11 // pred_region
          _
        $region28: #{tpu_custom_call.1} parent=11 // pred_fallthru
          _
        // Predicated region
        $region29: #{tpu_custom_call.1} parent=11 // pred_check
          %p325 = pneg %p156
        $region30: #{tpu_custom_call.1} parent=11 // pred_check_branch
          %327 = sbr.rel (%p325) target = $region32
        $region31: #{tpu_custom_call.1} parent=11 // pred_region
          %329 = vsyncadd [#allocation6], 0
          %s330 = sshll.u32 %s5, 4
          %s331 = int_to_ptr.hbm [resolvable:$true] %s330
          %s332 = sshll.u32 [#allocation7], 4
          %s333 = int_to_ptr.vmem [resolvable:$true] %s332
          %338 = dma.hbm_to_vmem [thread:$0]  %s331, 2048, %s333, [#allocation6], 128, 128, 8
        $region32: #{tpu_custom_call.1} parent=11 // pred_fallthru
          _
        // Predicated region
        $region33: #{tpu_custom_call.1} parent=11 // pred_check
          %p339 = pneg %p177
        $region34: #{tpu_custom_call.1} parent=11 // pred_check_branch
          %341 = sbr.rel (%p339) target = $region36
        $region35: #{tpu_custom_call.1} parent=11 // pred_region
          _
        $region36: #{tpu_custom_call.1} parent=11 // pred_fallthru
          _
        // Predicated region
        $region37: #{tpu_custom_call.1} parent=11 // pred_check
          %p342 = pneg %p198
        $region38: #{tpu_custom_call.1} parent=11 // pred_check_branch
          %344 = sbr.rel (%p342) target = $region40
        $region39: #{tpu_custom_call.1} parent=11 // pred_region
          _
        $region40: #{tpu_custom_call.1} parent=11 // pred_fallthru
          _
        // Predicated region
        $region41: #{tpu_custom_call.1} parent=11 // pred_check
          %p345 = pneg %p219
        $region42: #{tpu_custom_call.1} parent=11 // pred_check_branch
          %347 = sbr.rel (%p345) target = $region44
        $region43: #{tpu_custom_call.1} parent=11 // pred_region
          _
        $region44: #{tpu_custom_call.1} parent=11 // pred_fallthru
          _
        // Predicated region
        $region45: #{tpu_custom_call.1} parent=11 // pred_check
          %p348 = pneg %p240
        $region46: #{tpu_custom_call.1} parent=11 // pred_check_branch
          %350 = sbr.rel (%p348) target = $region48
        $region47: #{tpu_custom_call.1} parent=11 // pred_region
          %352 = vsyncadd [#allocation9], 0
          %s353 = sshll.u32 %s9, 4
          %s354 = int_to_ptr.hbm [resolvable:$true] %s353
          %s355 = sshll.u32 [#allocation8], 4
          %s356 = int_to_ptr.vmem [resolvable:$true] %s355
          %361 = dma.hbm_to_vmem [thread:$0]  %s354, 2048, %s356, [#allocation9], 128, 128, 8
        $region48: #{tpu_custom_call.1} parent=11 // pred_fallthru
          _
        // Predicated region
        $region49: #{tpu_custom_call.1} parent=11 // pred_check
          %p362 = pneg %p261
        $region50: #{tpu_custom_call.1} parent=11 // pred_check_branch
          %364 = sbr.rel (%p362) target = $region52
        $region51: #{tpu_custom_call.1} parent=11 // pred_region
          _
        $region52: #{tpu_custom_call.1} parent=11 // pred_fallthru
          _
      $region12: #{tpu_custom_call.1} parent=5 // pred_fallthru
        _
      %p365 = scmp.lt.s32.totalorder %s25, 4
      // Predicated region
      $region53: #{tpu_custom_call.1} parent=5 // pred_check
        %p366 = pneg %p365
      $region54: #{tpu_custom_call.1} parent=5 // pred_check_branch
        %368 = sbr.rel (%p366) target = $region56
      $region55: #{tpu_custom_call.1} parent=5 // pred_region
        // Predicated region
        $region57: #{tpu_custom_call.1} parent=55 // pred_check
          %p369 = pneg %p45
        $region58: #{tpu_custom_call.1} parent=55 // pred_check_branch
          %371 = sbr.rel (%p369) target = $region60
        $region59: #{tpu_custom_call.1} parent=55 // pred_region
          %s372 = sand.u32 %s35, 1
          %s373 = scalar_lea.sflag [#allocation3], %s372
          %s374 = sand.u32 %s35, 1
          %s375 = smul.addr %s374, 8
          %s376 = scalar_lea.vmem [#allocation2], %s375
          %378 = vsyncadd %s373, 0
          %s379 = smul.addr %s25, 8
          %s380 = scalar_lea.hbm %s0, %s379
          %s382 = sshll.u32 %s380, 4
          %s383 = int_to_ptr.hbm [resolvable:$true] %s382
          %s384 = sshll.u32 %s376, 4
          %s385 = int_to_ptr.vmem [resolvable:$true] %s384
          %387 = dma.hbm_to_vmem [thread:$0]  %s383, 128, %s385, %s373
        $region60: #{tpu_custom_call.1} parent=55 // pred_fallthru
          _
      $region56: #{tpu_custom_call.1} parent=5 // pred_fallthru
        _
      %p388 = scmp.le.s32.totalorder 1, %s25
      %p389 = scmp.lt.s32.totalorder %s25, 5
      %p390 = pnand %p388, %p389
      %p391 = pneg %p390
      // Predicated region
      $region61: #{tpu_custom_call.1} parent=5 // pred_check
        _
      $region62: #{tpu_custom_call.1} parent=5 // pred_check_branch
        %393 = sbr.rel (%p390) target = $region64
      $region63: #{tpu_custom_call.1} parent=5 // pred_region
        %s394 = ssub.s32 %s25, 1
        %s395 = sand.u32 %s38, 1
        %s396 = scalar_lea.sflag [#allocation3], %s395
        %s397 = sand.u32 %s38, 1
        %s398 = smul.addr %s397, 8
        %s399 = scalar_lea.vmem [#allocation2], %s398
        // Predicated region
        $region65: #{tpu_custom_call.1} parent=63 // pred_check
          %p400 = pneg %p51
        $region66: #{tpu_custom_call.1} parent=63 // pred_check_branch
          %402 = sbr.rel (%p400) target = $region68
        $region67: #{tpu_custom_call.1} parent=63 // pred_region
          %404 = dma.done %s396, 128
        $region68: #{tpu_custom_call.1} parent=63 // pred_fallthru
          _
        // Predicated region
        $region69: #{tpu_custom_call.1} parent=63 // pred_check
          %p405 = pneg %p72
        $region70: #{tpu_custom_call.1} parent=63 // pred_check_branch
          %407 = sbr.rel (%p405) target = $region72
        $region71: #{tpu_custom_call.1} parent=63 // pred_region
          %409 = dma.done [#allocation6], 2048
        $region72: #{tpu_custom_call.1} parent=63 // pred_fallthru
          _
        // Predicated region
        $region73: #{tpu_custom_call.1} parent=63 // pred_check
          %p410 = pneg %p156
        $region74: #{tpu_custom_call.1} parent=63 // pred_check_branch
          %412 = sbr.rel (%p410) target = $region76
        $region75: #{tpu_custom_call.1} parent=63 // pred_region
          %414 = dma.done [#allocation6], 2048
        $region76: #{tpu_custom_call.1} parent=63 // pred_fallthru
          _
        // Predicated region
        $region77: #{tpu_custom_call.1} parent=63 // pred_check
          %p415 = pneg %p240
        $region78: #{tpu_custom_call.1} parent=63 // pred_check_branch
          %417 = sbr.rel (%p415) target = $region80
        $region79: #{tpu_custom_call.1} parent=63 // pred_region
          %419 = dma.done [#allocation9], 2048
        $region80: #{tpu_custom_call.1} parent=63 // pred_fallthru
          _
        %s420 = sand.u32 %s38, 1
        %s421 = scalar_lea.sflag [#allocation3], %s420
        %s422 = sand.u32 %s38, 1
        %s423 = smul.addr %s422, 8
        %s424 = scalar_lea.vmem [#allocation2], %s423
        %p425 = pneg %p51
        %p426 = pneg %p48
        %p427 = pneg %p72
        %p428 = pneg %p69
        %p429 = pneg %p93
        %p430 = pneg %p90
        %p431 = pneg %p114
        %p432 = pneg %p111
        %p433 = pneg %p135
        %p434 = pneg %p132
        %p435 = pneg %p156
        %p436 = pneg %p153
        %p437 = pneg %p177
        %p438 = pneg %p174
        %p439 = pneg %p198
        %p440 = pneg %p195
        %p441 = pneg %p219
        %p442 = pneg %p216
        %p443 = pneg %p240
        %p444 = pneg %p237
        %p445 = pneg %p261
        %p446 = pneg %p258
        %p447 = pneg %p287
        %p448 = pneg %p284
        %s449 = sand.u32 %s274, 1
        %s450 = scalar_lea.sflag [#allocation4], %s449
        %s451 = sand.u32 %s274, 1
        %s452 = smul.addr %s451, 8
        %s453 = scalar_lea.vmem [#allocation10], %s452
        %v454 = vld [vmem:[%s399] sm:$0xff]
        %v455 = vld [vmem:[#allocation5] sm:$0xff]
        %v456 = vld [vmem:[#allocation5 + $0x8] sm:$0xff]
        %v457 = vld [vmem:[#allocation5 + $0x10] sm:$0xff]
        %v458 = vld [vmem:[#allocation5 + $0x18] sm:$0xff]
        %v459 = vld [vmem:[#allocation5 + $0x20] sm:$0xff]
        %v460 = vld [vmem:[#allocation5 + $0x28] sm:$0xff]
        %v461 = vld [vmem:[#allocation5 + $0x30] sm:$0xff]
        %v462 = vld [vmem:[#allocation5 + $0x38] sm:$0xff]
        %v463 = vld [vmem:[#allocation5 + $0x40] sm:$0xff]
        %v464 = vld [vmem:[#allocation5 + $0x48] sm:$0xff]
        %v465 = vld [vmem:[#allocation5 + $0x50] sm:$0xff]
        %v466 = vld [vmem:[#allocation5 + $0x58] sm:$0xff]
        %v467 = vld [vmem:[#allocation5 + $0x60] sm:$0xff]
        %v468 = vld [vmem:[#allocation5 + $0x68] sm:$0xff]
        %v469 = vld [vmem:[#allocation5 + $0x70] sm:$0xff]
        %v470 = vld [vmem:[#allocation5 + $0x78] sm:$0xff]
        %v471 = vld [vmem:[%s2] sm:$0x1]
        %v473 = vperm.slane %v471, 0
        %475 = vmatpush.msra.mxu0 %v470
        %476 = vmatpush.msra.mxu0 %v469
        %477 = vmatpush.msra.mxu0 %v468
        %478 = vmatpush.msra.mxu0 %v467
        %479 = vmatpush.msra.mxu0 %v466
        %480 = vmatpush.msra.mxu0 %v465
        %481 = vmatpush.msra.mxu0 %v464
        %482 = vmatpush.msra.mxu0 %v463
        %483 = vmatpush.msra.mxu0 %v462
        %484 = vmatpush.msra.mxu0 %v461
        %485 = vmatpush.msra.mxu0 %v460
        %486 = vmatpush.msra.mxu0 %v459
        %487 = vmatpush.msra.mxu0 %v458
        %488 = vmatpush.msra.mxu0 %v457
        %489 = vmatpush.msra.mxu0 %v456
        %490 = vmatpush.msra.mxu0 %v455
        %491 = vmatmul.f32.gmra.mxu0 %v454
        %v492 = vpop.f32.mrf.mxu0
        %v493 = vadd.f32 %v473, %v492
        %494 = vdwg.mxu0
        %v495 = vmax.f32 %v493, 0.0
        %v496 = vld [vmem:[%s3] sm:$0x1]
        %v497 = vld [vmem:[%s4] sm:$0x1]
        %v498 = vrot.slane %v495, 4
        %v499 = vadd.f32 %v495, %v498
        %v500 = vrot.slane %v499, 2
        %v501 = vadd.f32 %v499, %v500
        %v502 = vrot.slane %v501, 1
        %v503 = vadd.f32 %v501, %v502
        %v504 = vrcp.pop 8.0
        %v505 = vmul.f32 8.0, %v504
        %v506 = vsub.f32 1.0, %v505
        %v507 = vmul.f32 %v504, %v506
        %v508 = vadd.f32 %v504, %v507
        %vm509 = vweird.f32 %v504
        %v510 = vsel %vm509, %v504, %v508
        %v511 = vmul.f32 %v503, %v510
        %v512 = vmul.f32 %v495, %v495
        %v513 = vrot.slane %v512, 4
        %v514 = vadd.f32 %v512, %v513
        %v515 = vrot.slane %v514, 2
        %v516 = vadd.f32 %v514, %v515
        %v517 = vrot.slane %v516, 1
        %v518 = vadd.f32 %v516, %v517
        %v519 = vmul.f32 %v518, %v510
        %v520 = vmul.f32 %v511, %v511
        %v521 = vsub.f32 %v519, %v520
        %v522 = vadd.f32 %v521, 1e-05
        %v523 = vrsqrt.pop %v522
        %v524 = vmul.f32 %v523, %v522
        %v525 = vmul.f32 %v524, %v523
        %v526 = vmul.f32 0.5, %v525
        %v527 = vsub.f32 1.5, %v526
        %v528 = vmul.f32 %v523, %v527
        %vm529 = vweird.f32 %v522
        %vm530 = vweird.f32 %v523
        %vm531 = vmor %vm529, %vm530
        %v532 = vsel %vm531, %v523, %v528
        %v533 = vmul.f32 %v496, %v532
        %v534 = vmul.f32 %v511, %v533
        %v535 = vsub.f32 %v497, %v534
        %v537 = vperm.slane %v533, 0
        %v539 = vmul.f32 %v495, %v537
        %v541 = vperm.slane %v535, 0
        %v543 = vadd.f32 %v539, %v541
        %v544 = vld [vmem:[#allocation7] sm:$0xff]
        %v545 = vld [vmem:[#allocation7 + $0x8] sm:$0xff]
        %v546 = vld [vmem:[#allocation7 + $0x10] sm:$0xff]
        %v547 = vld [vmem:[#allocation7 + $0x18] sm:$0xff]
        %v548 = vld [vmem:[#allocation7 + $0x20] sm:$0xff]
        %v549 = vld [vmem:[#allocation7 + $0x28] sm:$0xff]
        %v550 = vld [vmem:[#allocation7 + $0x30] sm:$0xff]
        %v551 = vld [vmem:[#allocation7 + $0x38] sm:$0xff]
        %v552 = vld [vmem:[#allocation7 + $0x40] sm:$0xff]
        %v553 = vld [vmem:[#allocation7 + $0x48] sm:$0xff]
        %v554 = vld [vmem:[#allocation7 + $0x50] sm:$0xff]
        %v555 = vld [vmem:[#allocation7 + $0x58] sm:$0xff]
        %v556 = vld [vmem:[#allocation7 + $0x60] sm:$0xff]
        %v557 = vld [vmem:[#allocation7 + $0x68] sm:$0xff]
        %v558 = vld [vmem:[#allocation7 + $0x70] sm:$0xff]
        %v559 = vld [vmem:[#allocation7 + $0x78] sm:$0xff]
        %v560 = vld [vmem:[%s6] sm:$0x1]
        %v562 = vperm.slane %v560, 0
        %564 = vmatpush.msra.mxu0 %v559
        %565 = vmatpush.msra.mxu0 %v558
        %566 = vmatpush.msra.mxu0 %v557
        %567 = vmatpush.msra.mxu0 %v556
        %568 = vmatpush.msra.mxu0 %v555
        %569 = vmatpush.msra.mxu0 %v554
        %570 = vmatpush.msra.mxu0 %v553
        %571 = vmatpush.msra.mxu0 %v552
        %572 = vmatpush.msra.mxu0 %v551
        %573 = vmatpush.msra.mxu0 %v550
        %574 = vmatpush.msra.mxu0 %v549
        %575 = vmatpush.msra.mxu0 %v548
        %576 = vmatpush.msra.mxu0 %v547
        %577 = vmatpush.msra.mxu0 %v546
        %578 = vmatpush.msra.mxu0 %v545
        %579 = vmatpush.msra.mxu0 %v544
        %580 = vmatmul.f32.gmra.mxu0 %v543
        %v581 = vpop.f32.mrf.mxu0
        %v582 = vadd.f32 %v562, %v581
        %583 = vdwg.mxu0
        %v584 = vtanh.pop %v582
        %v585 = vld [vmem:[%s7] sm:$0x1]
        %v586 = vld [vmem:[%s8] sm:$0x1]
        %v587 = vrot.slane %v584, 4
        %v588 = vadd.f32 %v584, %v587
        %v589 = vrot.slane %v588, 2
        %v590 = vadd.f32 %v588, %v589
        %v591 = vrot.slane %v590, 1
        %v592 = vadd.f32 %v590, %v591
        %v593 = vmul.f32 %v592, %v510
        %v594 = vmul.f32 %v584, %v584
        %v595 = vrot.slane %v594, 4
        %v596 = vadd.f32 %v594, %v595
        %v597 = vrot.slane %v596, 2
        %v598 = vadd.f32 %v596, %v597
        %v599 = vrot.slane %v598, 1
        %v600 = vadd.f32 %v598, %v599
        %v601 = vmul.f32 %v600, %v510
        %v602 = vmul.f32 %v593, %v593
        %v603 = vsub.f32 %v601, %v602
        %v604 = vadd.f32 %v603, 1e-05
        %v605 = vrsqrt.pop %v604
        %v606 = vmul.f32 %v605, %v604
        %v607 = vmul.f32 %v606, %v605
        %v608 = vmul.f32 0.5, %v607
        %v609 = vsub.f32 1.5, %v608
        %v610 = vmul.f32 %v605, %v609
        %vm611 = vweird.f32 %v604
        %vm612 = vweird.f32 %v605
        %vm613 = vmor %vm611, %vm612
        %v614 = vsel %vm613, %v605, %v610
        %v615 = vmul.f32 %v585, %v614
        %v616 = vmul.f32 %v593, %v615
        %v617 = vsub.f32 %v586, %v616
        %v619 = vperm.slane %v615, 0
        %v621 = vmul.f32 %v584, %v619
        %v623 = vperm.slane %v617, 0
        %v625 = vadd.f32 %v621, %v623
        %v626 = vld [vmem:[#allocation8] sm:$0xff]
        %v627 = vld [vmem:[#allocation8 + $0x8] sm:$0xff]
        %v628 = vld [vmem:[#allocation8 + $0x10] sm:$0xff]
        %v629 = vld [vmem:[#allocation8 + $0x18] sm:$0xff]
        %v630 = vld [vmem:[#allocation8 + $0x20] sm:$0xff]
        %v631 = vld [vmem:[#allocation8 + $0x28] sm:$0xff]
        %v632 = vld [vmem:[#allocation8 + $0x30] sm:$0xff]
        %v633 = vld [vmem:[#allocation8 + $0x38] sm:$0xff]
        %v634 = vld [vmem:[#allocation8 + $0x40] sm:$0xff]
        %v635 = vld [vmem:[#allocation8 + $0x48] sm:$0xff]
        %v636 = vld [vmem:[#allocation8 + $0x50] sm:$0xff]
        %v637 = vld [vmem:[#allocation8 + $0x58] sm:$0xff]
        %v638 = vld [vmem:[#allocation8 + $0x60] sm:$0xff]
        %v639 = vld [vmem:[#allocation8 + $0x68] sm:$0xff]
        %v640 = vld [vmem:[#allocation8 + $0x70] sm:$0xff]
        %v641 = vld [vmem:[#allocation8 + $0x78] sm:$0xff]
        %v642 = vld [vmem:[%s10] sm:$0x1]
        %v644 = vperm.slane %v642, 0
        %646 = vmatpush.msra.mxu0 %v641
        %647 = vmatpush.msra.mxu0 %v640
        %648 = vmatpush.msra.mxu0 %v639
        %649 = vmatpush.msra.mxu0 %v638
        %650 = vmatpush.msra.mxu0 %v637
        %651 = vmatpush.msra.mxu0 %v636
        %652 = vmatpush.msra.mxu0 %v635
        %653 = vmatpush.msra.mxu0 %v634
        %654 = vmatpush.msra.mxu0 %v633
        %655 = vmatpush.msra.mxu0 %v632
        %656 = vmatpush.msra.mxu0 %v631
        %657 = vmatpush.msra.mxu0 %v630
        %658 = vmatpush.msra.mxu0 %v629
        %659 = vmatpush.msra.mxu0 %v628
        %660 = vmatpush.msra.mxu0 %v627
        %661 = vmatpush.msra.mxu0 %v626
        %662 = vmatmul.f32.gmra.mxu0 %v625
        %v663 = vpop.f32.mrf.mxu0
        %v664 = vadd.f32 %v644, %v663
        %665 = vdwg.mxu0
        %v666 = vsub.f32 0.0, %v664
        %v667 = vmul.f32 %v666, 1.442695
        %v668 = vpow.pop %v667
        %v669 = vadd.f32 %v668, 1.0
        %v670 = vrcp.pop %v669
        %671 = vst [vmem:[%s453] sm:$0xff] %v670
        %s672 = sand.u32 %s274, 1
        %s673 = scalar_lea.sflag [#allocation4], %s672
        %s674 = sand.u32 %s274, 1
        %s675 = smul.addr %s674, 8
        %s676 = scalar_lea.vmem [#allocation10], %s675
        // Predicated region
        $region81: #{tpu_custom_call.1} parent=63 // pred_check
          %p677 = pneg %p284
        $region82: #{tpu_custom_call.1} parent=63 // pred_check_branch
          %679 = sbr.rel (%p677) target = $region84
        $region83: #{tpu_custom_call.1} parent=63 // pred_region
          %681 = vsyncadd %s673, 0
          %s682 = smul.addr %s30, 8
          %s683 = scalar_lea.hbm %s11, %s682
          %s685 = sshll.u32 %s676, 4
          %s686 = int_to_ptr.vmem [resolvable:$true] %s685
          %s687 = sshll.u32 %s683, 4
          %s688 = int_to_ptr.hbm [resolvable:$true] %s687
          %690 = dma.vmem_to_hbm [thread:$0]  %s686, 128, %s688, %s673
        $region84: #{tpu_custom_call.1} parent=63 // pred_fallthru
          _
      $region64: #{tpu_custom_call.1} parent=5 // pred_fallthru
        _
      %p691 = scmp.le.s32.totalorder 2, %s25
      // Predicated region
      $region85: #{tpu_custom_call.1} parent=5 // pred_check
        %p692 = pneg %p691
      $region86: #{tpu_custom_call.1} parent=5 // pred_check_branch
        %694 = sbr.rel (%p692) target = $region88
      $region87: #{tpu_custom_call.1} parent=5 // pred_region
        %s695 = ssub.s32 %s25, 2
        // Predicated region
        $region89: #{tpu_custom_call.1} parent=87 // pred_check
          %p696 = pneg %p290
        $region90: #{tpu_custom_call.1} parent=87 // pred_check_branch
          %698 = sbr.rel (%p696) target = $region92
        $region91: #{tpu_custom_call.1} parent=87 // pred_region
          %s699 = sand.u32 %s275, 1
          %s700 = scalar_lea.sflag [#allocation4], %s699
          %s701 = sand.u32 %s275, 1
          %s702 = smul.addr %s701, 8
          %s703 = scalar_lea.vmem [#allocation10], %s702
          %705 = dma.done %s700, 128
        $region92: #{tpu_custom_call.1} parent=87 // pred_fallthru
          _
      $region88: #{tpu_custom_call.1} parent=5 // pred_fallthru
        _
    $region6: #{tpu_custom_call.1} parent=1 // loop_footer
      %s29 = sadd.s32 1, %s25
    $region7: #{tpu_custom_call.1} parent=1 // loop_footer_branch
      %24 = sbr.rel target = $region3
    $region8: #{tpu_custom_call.1} parent=1 // loop_exit
      _
    %706 = vsyncpa [#allocation3], 1
    %s707 = scalar_lea.sflag [#allocation3], 1
    %708 = vsyncpa %s707, 1
    %709 = vsyncpa [#allocation6], 1
    %710 = vsyncpa [#allocation9], 1
    %711 = vsyncpa [#allocation4], 1
    %s712 = scalar_lea.sflag [#allocation4], 1
    %713 = vsyncpa %s712, 1

</llo_original>
